<compile_context>
chip_gen: v7x
topology: tpu7x:2x2x1
jax: 0.10.0
libtpu: 0.0.40
codegen_flags: <defaults>
</compile_context>

<pallas_src>
import functools
import math

import jax
import jax.numpy as jnp
import numpy as np
from jax.experimental import pallas as pl
from jax.experimental.pallas import tpu as pltpu


def _energy_kernel(q_ref, k_ref, lens_ref, r_ref, out_ref, *, n_heads, neg_inf):
    """One grid step: energies for one (batch, q-tile, k-tile) block, all heads."""
    b = pl.program_id(0)
    ki = pl.program_id(2)
    tq, tk = out_ref.shape[2], out_ref.shape[3]

    # Key-padding mask rebuilt from the per-batch valid length (no dense mask in HBM).
    col = jax.lax.broadcasted_iota(jnp.int32, (tq, tk), 1) + ki * tk
    masked = col >= lens_ref[b]                               # [TQ, TK] bool
    r = r_ref[0, 0]

    # Per-head QK^T: heads live on the leading block axes, so these are aligned static
    # slices; contraction is over d_k (dim 0 of both operands), MXU-native.
    # TODO(synk): if this ever becomes MXU-bound (it is HBM-write bound today), switch
    # the head loop to a single batched dot_general over [H, d_k, TQ] x [H, d_k, TK].
    for h in range(n_heads):
        qh = q_ref[0, h, :, :]                                # [d_k, TQ] bf16 (scale folded in)
        kh = k_ref[0, h, :, :]                                # [d_k, TK] bf16
        e = jax.lax.dot_general(qh, kh, (((0,), (0,)), ((), ())),
                                preferred_element_type=jnp.float32)   # [TQ, TK] f32
        out_ref[0, h, :, :] = jnp.where(masked, neg_inf, e + r).astype(out_ref.dtype)


def monotonic_energy(key, query, key_lens, wk, bk, wq, bq, r, *, n_heads,
                     tq=512, tk=1024,
                     out_dtype=jnp.float32, compute_dtype=jnp.bfloat16):
    """MonotonicEnergy forward (scaled_dot).

    key:      [B, klen, kdim]   query: [B, qlen, qdim]
    key_lens: [B] int           (valid key lengths; mask[b,:,k] = k < key_lens[b])
    wk/wq:    PyTorch-Linear layout [adim, in];  bk/bq: [adim];  r: [1]
    returns:  [B, n_heads, qlen, klen] energies (masked positions = finfo(out_dtype).min)
    """
    B, klen, kdim = key.shape
    _, qlen, qdim = query.shape
    adim = wk.shape[0]
    assert adim % n_heads == 0
    assert tq % 128 == 0 and tk % 128 == 0
    d_k = adim // n_heads
    inv_scale = 1.0 / math.sqrt(adim)

    # Host-side projections (f32, once per batch) in heads-major transposed layout;
    # the 1/sqrt(adim) scale is folded into q so the in-kernel epilogue is add+select.
    k_projT = (jnp.einsum('ad,bkd->bak', wk.astype(jnp.float32), key.astype(jnp.float32))
               + bk.astype(jnp.float32)[None, :, None])                   # [B, adim, klen]
    q_projT = (jnp.einsum('ad,bqd->baq', wq.astype(jnp.float32), query.astype(jnp.float32))
               + bq.astype(jnp.float32)[None, :, None])                   # [B, adim, qlen]
    k_projT = k_projT.reshape(B, n_heads, d_k, klen).astype(compute_dtype)
    q_projT = (q_projT * inv_scale).reshape(B, n_heads, d_k, qlen).astype(compute_dtype)

    # Tile sizes: if the whole length fits one tile, use it exactly (block == full dim
    # is always legal); otherwise a 128-multiple tile and Pallas masks the edge block.
    TQ = qlen if qlen <= tq else tq
    TK = klen if klen <= tk else tk
    grid = (B, pl.cdiv(qlen, TQ), pl.cdiv(klen, TK))

    lens32 = key_lens.astype(jnp.int32)                   # SMEM
    r2 = jnp.asarray(r, dtype=jnp.float32).reshape(1, 1)  # SMEM scalar
    neg_inf = float(jnp.finfo(out_dtype).min)

    kernel = functools.partial(_energy_kernel, n_heads=n_heads, neg_inf=neg_inf)

    return pl.pallas_call(
        kernel,
        out_shape=jax.ShapeDtypeStruct((B, n_heads, qlen, klen), out_dtype),
        grid=grid,
        in_specs=[
            pl.BlockSpec((1, n_heads, d_k, TQ), lambda b, qi, ki: (b, 0, 0, qi)),  # q_projT
            pl.BlockSpec((1, n_heads, d_k, TK), lambda b, qi, ki: (b, 0, 0, ki)),  # k_projT
            pl.BlockSpec(memory_space=pltpu.MemorySpace.SMEM),                      # key_lens
            pl.BlockSpec(memory_space=pltpu.MemorySpace.SMEM),                      # r
        ],
        out_specs=pl.BlockSpec((1, n_heads, TQ, TK), lambda b, qi, ki: (b, 0, qi, ki)),
        compiler_params=pltpu.CompilerParams(
            dimension_semantics=("parallel", "parallel", "parallel"),
            vmem_limit_bytes=48 * 1024 * 1024),
    )(q_projT, k_projT, lens32, r2)


def reference_energy(key, query, mask, wk, bk, wq, bq, r, *, n_heads):
    """Pure-JAX f32 reference mirroring the PyTorch forward (scaled_dot path)."""
    B, klen, _ = key.shape
    qlen = query.shape[1]
    adim = wk.shape[0]
    d_k = adim // n_heads
    scale = math.sqrt(adim)
    k_proj = key @ wk.T + bk
    q_proj = query @ wq.T + bq
    k_h = k_proj.reshape(B, klen, n_heads, d_k).transpose(0, 2, 1, 3)
    q_h = q_proj.reshape(B, qlen, n_heads, d_k).transpose(0, 2, 1, 3)
    e = jnp.einsum('bhqd,bhkd->bhqk', q_h, k_h) / scale + r[0]
    m = mask[:, None, :, :]
    return jnp.where(m == 0, jnp.finfo(jnp.float32).min, e)


if __name__ == "__main__":
    # Small shapes consistent with the module's forward.
    B, klen, qlen = 2, 16, 8
    kdim, qdim, adim, n_heads = 32, 32, 32, 4
    init_r = -4.0

    root = jax.random.PRNGKey(0)
    k_key, k_query, k_wk, k_bk, k_wq, k_bq = jax.random.split(root, 6)

    key = jax.random.normal(k_key, (B, klen, kdim), dtype=jnp.float32)
    query = jax.random.normal(k_query, (B, qlen, qdim), dtype=jnp.float32)

    # Per-batch valid key lengths (batch 0 keeps 12 keys, batch 1 keeps 16) and the
    # equivalent dense mask for the reference.
    key_lens = jnp.array([12, 16], dtype=jnp.int32)
    kpos = jnp.arange(klen, dtype=jnp.int32)
    mask = (kpos[None, None, :] < key_lens[:, None, None]).astype(jnp.int32)
    mask = jnp.broadcast_to(mask, (B, qlen, klen))

    # Deterministic parameter init (Linear weights [out, in], biases [out]).
    wk = 0.1 * jax.random.normal(k_wk, (adim, kdim), dtype=jnp.float32)
    bk = 0.1 * jax.random.normal(k_bk, (adim,), dtype=jnp.float32)
    wq = 0.1 * jax.random.normal(k_wq, (adim, qdim), dtype=jnp.float32)
    bq = 0.1 * jax.random.normal(k_bq, (adim,), dtype=jnp.float32)
    r = jnp.array([init_r], dtype=jnp.float32)

    # f32 output path (default): matches the PyTorch finfo(float32).min fill exactly.
    e = monotonic_energy(key, query, key_lens, wk, bk, wq, bq, r, n_heads=n_heads)
    e = jax.block_until_ready(e)
    e_ref = reference_energy(key, query, mask, wk, bk, wq, bq, r, n_heads=n_heads)
    np.testing.assert_allclose(np.asarray(e), np.asarray(e_ref), rtol=2e-2, atol=2e-2)
    assert e.shape == (B, n_heads, qlen, klen)

    # bf16 output path (halves the dominant HBM write traffic); check unmasked entries.
    e_bf = monotonic_energy(key, query, key_lens, wk, bk, wq, bq, r,
                            n_heads=n_heads, out_dtype=jnp.bfloat16)
    e_bf = jax.block_until_ready(e_bf)
    keep = np.asarray(jnp.broadcast_to(mask[:, None, :, :], e_ref.shape)) != 0
    np.testing.assert_allclose(np.asarray(e_bf).astype(np.float32)[keep],
                               np.asarray(e_ref)[keep], rtol=2e-2, atol=5e-2)

    print("KERNEL_OK")
</pallas_src>

<mosaic_0001>
module attributes {stable_mosaic.version = 11 : i64} {
  func.func @_energy_kernel(%arg0: i32, %arg1: i32, %arg2: i32, %arg3: memref<1x4x8x8xbf16, #tpu.memory_space<vmem>>, %arg4: memref<1x4x8x16xbf16, #tpu.memory_space<vmem>>, %arg5: memref<2xi32, #tpu.memory_space<smem>>, %arg6: memref<1x1xf32, #tpu.memory_space<smem>>, %arg7: memref<1x4x8x16xf32, #tpu.memory_space<vmem>>) attributes {dimension_semantics = [#tpu.dimension_semantics<parallel>, #tpu.dimension_semantics<parallel>, #tpu.dimension_semantics<parallel>], iteration_bounds = array<i64: 2, 1, 1>, scalar_prefetch = 0 : i64, scratch_operands = 0 : i64, tpu.core_type = #tpu.core_type<tc>, window_params = [{transform_indices = @transform_0, window_bounds = array<i64: 1, 4, 8, 8>}, {transform_indices = @transform_1, window_bounds = array<i64: 1, 4, 8, 16>}, {transform_indices = @transform_2, window_bounds = array<i64: 2>}, {transform_indices = @transform_3, window_bounds = array<i64: 1, 1>}, {transform_indices = @transform_4, window_bounds = array<i64: 1, 4, 8, 16>}]} {
    %0 = tpu.iota {dimensions = array<i32: 1>} : vector<8x16xi32>
    %c16_i32 = arith.constant 16 : i32
    %1 = arith.muli %arg2, %c16_i32 : i32
    %2 = vector.broadcast %1 : i32 to vector<8x16xi32>
    %3 = arith.addi %0, %2 : vector<8x16xi32>
    %4 = arith.index_cast %arg0 : i32 to index
    %5 = memref.load %arg5[%4] : memref<2xi32, #tpu.memory_space<smem>>
    %6 = vector.broadcast %5 : i32 to vector<8x16xi32>
    %7 = arith.cmpi sge, %3, %6 : vector<8x16xi32>
    %c0 = arith.constant 0 : index
    %c0_0 = arith.constant 0 : index
    %8 = memref.load %arg6[%c0, %c0_0] : memref<1x1xf32, #tpu.memory_space<smem>>
    %c0_1 = arith.constant 0 : index
    %c0_2 = arith.constant 0 : index
    %c0_3 = arith.constant 0 : index
    %c0_4 = arith.constant 0 : index
    %9 = vector.load %arg3[%c0_1, %c0_2, %c0_3, %c0_4] : memref<1x4x8x8xbf16, #tpu.memory_space<vmem>>, vector<1x1x8x8xbf16>
    %10 = vector.shape_cast %9 : vector<1x1x8x8xbf16> to vector<8x8xbf16>
    %c0_5 = arith.constant 0 : index
    %c0_6 = arith.constant 0 : index
    %c0_7 = arith.constant 0 : index
    %c0_8 = arith.constant 0 : index
    %11 = vector.load %arg4[%c0_5, %c0_6, %c0_7, %c0_8] : memref<1x4x8x16xbf16, #tpu.memory_space<vmem>>, vector<1x1x8x16xbf16>
    %12 = vector.shape_cast %11 : vector<1x1x8x16xbf16> to vector<8x16xbf16>
    %cst = arith.constant dense<0.000000e+00> : vector<8x16xf32>
    %13 = tpu.matmul %10, %12, %cst {dimension_numbers = #tpu.dot_dimension_numbers<[0], [0], [1], [1], [0, 1, 1, 1], [], []>} : vector<8x8xbf16>, vector<8x16xbf16>, vector<8x16xf32> -> vector<8x16xf32>
    %14 = vector.broadcast %8 : f32 to vector<8x16xf32>
    %15 = arith.addf %13, %14 : vector<8x16xf32>
    %cst_9 = arith.constant -3.40282347E+38 : f32
    %16 = vector.broadcast %cst_9 : f32 to vector<8x16xf32>
    %17 = arith.select %7, %16, %15 : vector<8x16xi1>, vector<8x16xf32>
    %c0_10 = arith.constant 0 : index
    %c0_11 = arith.constant 0 : index
    %c0_12 = arith.constant 0 : index
    %c0_13 = arith.constant 0 : index
    %18 = vector.load %arg7[%c0_10, %c0_11, %c0_12, %c0_13] : memref<1x4x8x16xf32, #tpu.memory_space<vmem>>, vector<1x1x8x16xf32>
    %19 = vector.shape_cast %18 : vector<1x1x8x16xf32> to vector<8x16xf32>
    %20 = vector.shape_cast %17 : vector<8x16xf32> to vector<1x1x8x16xf32>
    tpu.vector_store %arg7[%c0_10, %c0_11, %c0_12, %c0_13], %20 {strides = array<i32>} : memref<1x4x8x16xf32, #tpu.memory_space<vmem>>, vector<1x1x8x16xf32>,
    %c0_14 = arith.constant 0 : index
    %c1 = arith.constant 1 : index
    %c0_15 = arith.constant 0 : index
    %c0_16 = arith.constant 0 : index
    %21 = vector.load %arg3[%c0_14, %c1, %c0_15, %c0_16] : memref<1x4x8x8xbf16, #tpu.memory_space<vmem>>, vector<1x1x8x8xbf16>
    %22 = vector.shape_cast %21 : vector<1x1x8x8xbf16> to vector<8x8xbf16>
    %c0_17 = arith.constant 0 : index
    %c1_18 = arith.constant 1 : index
    %c0_19 = arith.constant 0 : index
    %c0_20 = arith.constant 0 : index
    %23 = vector.load %arg4[%c0_17, %c1_18, %c0_19, %c0_20] : memref<1x4x8x16xbf16, #tpu.memory_space<vmem>>, vector<1x1x8x16xbf16>
    %24 = vector.shape_cast %23 : vector<1x1x8x16xbf16> to vector<8x16xbf16>
    %cst_21 = arith.constant dense<0.000000e+00> : vector<8x16xf32>
    %25 = tpu.matmul %22, %24, %cst_21 {dimension_numbers = #tpu.dot_dimension_numbers<[0], [0], [1], [1], [0, 1, 1, 1], [], []>} : vector<8x8xbf16>, vector<8x16xbf16>, vector<8x16xf32> -> vector<8x16xf32>
    %26 = vector.broadcast %8 : f32 to vector<8x16xf32>
    %27 = arith.addf %25, %26 : vector<8x16xf32>
    %cst_22 = arith.constant -3.40282347E+38 : f32
    %28 = vector.broadcast %cst_22 : f32 to vector<8x16xf32>
    %29 = arith.select %7, %28, %27 : vector<8x16xi1>, vector<8x16xf32>
    %c0_23 = arith.constant 0 : index
    %c1_24 = arith.constant 1 : index
    %c0_25 = arith.constant 0 : index
    %c0_26 = arith.constant 0 : index
    %30 = vector.load %arg7[%c0_23, %c1_24, %c0_25, %c0_26] : memref<1x4x8x16xf32, #tpu.memory_space<vmem>>, vector<1x1x8x16xf32>
    %31 = vector.shape_cast %30 : vector<1x1x8x16xf32> to vector<8x16xf32>
    %32 = vector.shape_cast %29 : vector<8x16xf32> to vector<1x1x8x16xf32>
    tpu.vector_store %arg7[%c0_23, %c1_24, %c0_25, %c0_26], %32 {strides = array<i32>} : memref<1x4x8x16xf32, #tpu.memory_space<vmem>>, vector<1x1x8x16xf32>,
    %c0_27 = arith.constant 0 : index
    %c2 = arith.constant 2 : index
    %c0_28 = arith.constant 0 : index
    %c0_29 = arith.constant 0 : index
    %33 = vector.load %arg3[%c0_27, %c2, %c0_28, %c0_29] : memref<1x4x8x8xbf16, #tpu.memory_space<vmem>>, vector<1x1x8x8xbf16>
    %34 = vector.shape_cast %33 : vector<1x1x8x8xbf16> to vector<8x8xbf16>
    %c0_30 = arith.constant 0 : index
    %c2_31 = arith.constant 2 : index
    %c0_32 = arith.constant 0 : index
    %c0_33 = arith.constant 0 : index
    %35 = vector.load %arg4[%c0_30, %c2_31, %c0_32, %c0_33] : memref<1x4x8x16xbf16, #tpu.memory_space<vmem>>, vector<1x1x8x16xbf16>
    %36 = vector.shape_cast %35 : vector<1x1x8x16xbf16> to vector<8x16xbf16>
    %cst_34 = arith.constant dense<0.000000e+00> : vector<8x16xf32>
    %37 = tpu.matmul %34, %36, %cst_34 {dimension_numbers = #tpu.dot_dimension_numbers<[0], [0], [1], [1], [0, 1, 1, 1], [], []>} : vector<8x8xbf16>, vector<8x16xbf16>, vector<8x16xf32> -> vector<8x16xf32>
    %38 = vector.broadcast %8 : f32 to vector<8x16xf32>
    %39 = arith.addf %37, %38 : vector<8x16xf32>
    %cst_35 = arith.constant -3.40282347E+38 : f32
    %40 = vector.broadcast %cst_35 : f32 to vector<8x16xf32>
    %41 = arith.select %7, %40, %39 : vector<8x16xi1>, vector<8x16xf32>
    %c0_36 = arith.constant 0 : index
    %c2_37 = arith.constant 2 : index
    %c0_38 = arith.constant 0 : index
    %c0_39 = arith.constant 0 : index
    %42 = vector.load %arg7[%c0_36, %c2_37, %c0_38, %c0_39] : memref<1x4x8x16xf32, #tpu.memory_space<vmem>>, vector<1x1x8x16xf32>
    %43 = vector.shape_cast %42 : vector<1x1x8x16xf32> to vector<8x16xf32>
    %44 = vector.shape_cast %41 : vector<8x16xf32> to vector<1x1x8x16xf32>
    tpu.vector_store %arg7[%c0_36, %c2_37, %c0_38, %c0_39], %44 {strides = array<i32>} : memref<1x4x8x16xf32, #tpu.memory_space<vmem>>, vector<1x1x8x16xf32>,
    %c0_40 = arith.constant 0 : index
    %c3 = arith.constant 3 : index
    %c0_41 = arith.constant 0 : index
    %c0_42 = arith.constant 0 : index
    %45 = vector.load %arg3[%c0_40, %c3, %c0_41, %c0_42] : memref<1x4x8x8xbf16, #tpu.memory_space<vmem>>, vector<1x1x8x8xbf16>
    %46 = vector.shape_cast %45 : vector<1x1x8x8xbf16> to vector<8x8xbf16>
    %c0_43 = arith.constant 0 : index
    %c3_44 = arith.constant 3 : index
    %c0_45 = arith.constant 0 : index
    %c0_46 = arith.constant 0 : index
    %47 = vector.load %arg4[%c0_43, %c3_44, %c0_45, %c0_46] : memref<1x4x8x16xbf16, #tpu.memory_space<vmem>>, vector<1x1x8x16xbf16>
    %48 = vector.shape_cast %47 : vector<1x1x8x16xbf16> to vector<8x16xbf16>
    %cst_47 = arith.constant dense<0.000000e+00> : vector<8x16xf32>
    %49 = tpu.matmul %46, %48, %cst_47 {dimension_numbers = #tpu.dot_dimension_numbers<[0], [0], [1], [1], [0, 1, 1, 1], [], []>} : vector<8x8xbf16>, vector<8x16xbf16>, vector<8x16xf32> -> vector<8x16xf32>
    %50 = vector.broadcast %8 : f32 to vector<8x16xf32>
    %51 = arith.addf %49, %50 : vector<8x16xf32>
    %cst_48 = arith.constant -3.40282347E+38 : f32
    %52 = vector.broadcast %cst_48 : f32 to vector<8x16xf32>
    %53 = arith.select %7, %52, %51 : vector<8x16xi1>, vector<8x16xf32>
    %c0_49 = arith.constant 0 : index
    %c3_50 = arith.constant 3 : index
    %c0_51 = arith.constant 0 : index
    %c0_52 = arith.constant 0 : index
    %54 = vector.load %arg7[%c0_49, %c3_50, %c0_51, %c0_52] : memref<1x4x8x16xf32, #tpu.memory_space<vmem>>, vector<1x1x8x16xf32>
    %55 = vector.shape_cast %54 : vector<1x1x8x16xf32> to vector<8x16xf32>
    %56 = vector.shape_cast %53 : vector<8x16xf32> to vector<1x1x8x16xf32>
    tpu.vector_store %arg7[%c0_49, %c3_50, %c0_51, %c0_52], %56 {strides = array<i32>} : memref<1x4x8x16xf32, #tpu.memory_space<vmem>>, vector<1x1x8x16xf32>,
    return
  }
  func.func @transform_0(%arg0: i32, %arg1: i32, %arg2: i32) -> (i32, i32, i32, i32) {
    %c0_i32 = arith.constant 0 : i32
    %c0_i32_0 = arith.constant 0 : i32
    %c0_i32_1 = arith.constant 0 : i32
    return %arg0, %c0_i32, %c0_i32_0, %arg1 : i32, i32, i32, i32
  }
  func.func @transform_1(%arg0: i32, %arg1: i32, %arg2: i32) -> (i32, i32, i32, i32) {
    %c0_i32 = arith.constant 0 : i32
    %c0_i32_0 = arith.constant 0 : i32
    %c0_i32_1 = arith.constant 0 : i32
    return %arg0, %c0_i32, %c0_i32_0, %arg2 : i32, i32, i32, i32
  }
  func.func @transform_2(%arg0: i32, %arg1: i32, %arg2: i32) -> i32 {
    %c0_i32 = arith.constant 0 : i32
    %c0_i32_0 = arith.constant 0 : i32
    return %c0_i32 : i32
  }
  func.func @transform_3(%arg0: i32, %arg1: i32, %arg2: i32) -> (i32, i32) {
    %c0_i32 = arith.constant 0 : i32
    %c0_i32_0 = arith.constant 0 : i32
    %c0_i32_1 = arith.constant 0 : i32
    return %c0_i32, %c0_i32_0 : i32, i32
  }
  func.func @transform_4(%arg0: i32, %arg1: i32, %arg2: i32) -> (i32, i32, i32, i32) {
    %c0_i32 = arith.constant 0 : i32
    %c0_i32_0 = arith.constant 0 : i32
    return %arg0, %c0_i32, %arg1, %arg2 : i32, i32, i32, i32
  }
}

</mosaic_0001>

<llo_original>
// kernel: tpu_custom_call.1
$region0: #{tpu_custom_call.1}
  #allocation0 [shape = 'u32[]', space=smem, size = 0x4, offset = 0x4, fixed_abs, tag = 'smem constant byte address 0x4 - core index']
  #allocation1 [shape = 'u32[144,128]{1,0:T(1,128)}', space=vmem, size = 0x12000, scoped, tag = 'internal scratch']
  #allocation2 [shape = 'f32[1,1]{1,0:T(1,128)S(6)}', space=smem, size = 0x200, scoped, tag = 'scoped memory for tpu_custom_call.1']
  %s0 = inlined_call_operand.hbm [shape: bf16[2,4,8,8], index: 0, kind: input, shape index: {}]
  %s1 = inlined_call_operand.hbm [shape: bf16[2,4,8,16], index: 1, kind: input, shape index: {}]
  %s2 = inlined_call_operand.vmem [shape: s32[2], index: 2, kind: input, shape index: {}]
  %s3 = inlined_call_operand.<no memory space> [shape: f32[1,1], index: 3, kind: input, shape index: {}]
  %s4 = inlined_call_operand.hbm [shape: f32[2,4,8,16], index: 4, kind: output, shape index: {}]
  %s5 = sld [smem:[#allocation0]]
  $region61: #{tpu_custom_call.1} parent=0
    _
  %s7 = ssub.s32 1, %s5
  %s8 = scalar_select 0, %s7, %s5
  %9 = sst [smem:[#allocation2]] %s3
  $region1: #{tpu_custom_call.1} parent=0
    #allocation3 [shape = 'u8[16384]{0}', space=vmem, size = 0x4000, scoped, tag = 'input window, operand 0']
    #allocation4 [shape = 's32[2]{0}', space=sflag, size = 0x8, scoped, tag = 'scoped memory for tpu_custom_call.1']
    #allocation5 [shape = 's32[2]{0}', space=sflag, size = 0x8, scoped, tag = 'scoped memory for tpu_custom_call.1']
    #allocation6 [shape = 's32[2]{0}', space=sflag, size = 0x8, scoped, tag = 'scoped memory for tpu_custom_call.1']
    #allocation7 [shape = 'u8[16384]{0}', space=vmem, size = 0x4000, scoped, tag = 'input window, operand 1']
    #allocation8 [shape = 's32[2]{0}', space=sflag, size = 0x8, scoped, tag = 'scoped memory for tpu_custom_call.1']
    #allocation9 [shape = 'u8[512]{0}', space=smem, size = 0x200, scoped, tag = 'input window, operand 2, single buffered']
    #allocation10 [shape = 'u8[32768]{0}', space=vmem, size = 0x8000, scoped, tag = 'output window, operand 0']
    %10 = vsyncpa [#allocation4], 0
    %s11 = scalar_lea.sflag [#allocation4], 1
    %12 = vsyncpa %s11, 0
    %13 = vsyncpa [#allocation8], 0
    %s14 = scalar_lea.sflag [#allocation8], 1
    %15 = vsyncpa %s14, 0
    %16 = vsyncpa [#allocation6], 0
    %17 = vsyncpa [#allocation5], 0
    %s18 = scalar_lea.sflag [#allocation5], 1
    %19 = vsyncpa %s18, 0
    loop: start=0, step=1, limit=4
    $region2: #{tpu_custom_call.1} parent=1 // loop_pre_header
      _
    $region3: #{tpu_custom_call.1} parent=1 // loop_header
      %s21 = sphi 0, %s25
      %p22 = scmp.ge.s32.totalorder %s21, 4
      %s28 = sphi 0, %s47
      %s29 = sphi 0, %s43
      %s30 = sphi 0, %s39
      %s31 = sphi 0, %s28
      %s32 = sphi 0, %s29
      %s33 = sphi 0, %s30
      %s34 = sphi 0, %s31
      %s35 = sphi 0, %s32
      %s36 = sphi 0, %s33
      %s52 = sphi 0, %s54
      %s55 = sphi 0, %s52
      %s56 = sphi 0, %s55
      %s72 = sphi 0, %s56
      %s80 = sphi 0, %s82
      %s83 = sphi 0, %s80
      %s84 = sphi 0, %s83
      %s100 = sphi 0, %s84
      %s104 = sphi 0, %s104
      %s106 = sphi 0, %s104
      %s107 = sphi 0, %s106
      %s121 = sphi 0, %s107
      %s125 = sphi 0, %s125
      %s127 = sphi 0, %s125
      %s128 = sphi 0, %s127
      %s142 = sphi 0, %s128
      %s152 = sphi 0, %s154
      %s155 = sphi 0, %s152
      %s156 = sphi 0, %s155
      %s172 = sphi 0, %s156
    $region4: #{tpu_custom_call.1} parent=1 // loop_header_branch
      %24 = sbr.rel (%p22) target = $region8
    $region5: #{tpu_custom_call.1} parent=1 // loop_body
      %s26 = ssub.s32 %s21, 1
      %s27 = ssub.s32 %s21, 2
      %s37 = sadd.s32 1, %s30
      %p38 = scmp.ge.s32.totalorder %s37, 1
      %s39 = scalar_select %p38, 0, %s37
      %s40 = sadd.s32 1, %s29
      %s41 = scalar_select %p38, %s40, %s29
      %p42 = scmp.ge.s32.totalorder %s41, 1
      %s43 = scalar_select %p42, 0, %s41
      %s44 = sadd.s32 1, %s28
      %s45 = scalar_select %p42, %s44, %s28
      %p46 = scmp.ge.s32.totalorder %s45, 2
      %s47 = scalar_select %p46, 0, %s45
      %s48 = ssub.s32 %s28, %s47
      %s49 = ssub.s32 %s29, %s43
      %s50 = sor.u32 %s48, %s49
      %p51 = scmp.eq.s32.totalorder %s50, 0
      %s53 = sadd.s32 %s52, 1
      %s54 = scalar_select %p51, %s52, %s53
      %p57 = pneg %p51
      %p58 = scmp.eq.s32.totalorder %s21, 1
      %p59 = por %p57, %p58
      %p60 = scmp.ne.s32.totalorder %s52, %s55
      %p61 = scmp.eq.s32.totalorder %s21, 0
      %p62 = por %p60, %p61
      %p63 = scmp.ne.s32.totalorder %s52, %s55
      %p64 = scmp.eq.s32.totalorder %s26, 1
      %p65 = por %p63, %p64
      %p66 = scmp.ne.s32.totalorder %s55, %s56
      %p67 = scmp.eq.s32.totalorder %s26, 0
      %p68 = por %p66, %p67
      %p69 = scmp.ne.s32.totalorder %s55, %s56
      %p70 = scmp.eq.s32.totalorder %s27, 1
      %p71 = por %p69, %p70
      %p73 = scmp.ne.s32.totalorder %s56, %s72
      %p74 = scmp.eq.s32.totalorder %s27, 0
      %p75 = por %p73, %p74
      %s76 = ssub.s32 %s28, %s47
      %s77 = ssub.s32 %s30, %s39
      %s78 = sor.u32 %s76, %s77
      %p79 = scmp.eq.s32.totalorder %s78, 0
      %s81 = sadd.s32 %s80, 1
      %s82 = scalar_select %p79, %s80, %s81
      %p85 = pneg %p79
      %p86 = scmp.eq.s32.totalorder %s21, 1
      %p87 = por %p85, %p86
      %p88 = scmp.ne.s32.totalorder %s80, %s83
      %p89 = scmp.eq.s32.totalorder %s21, 0
      %p90 = por %p88, %p89
      %p91 = scmp.ne.s32.totalorder %s80, %s83
      %p92 = scmp.eq.s32.totalorder %s26, 1
      %p93 = por %p91, %p92
      %p94 = scmp.ne.s32.totalorder %s83, %s84
      %p95 = scmp.eq.s32.totalorder %s26, 0
      %p96 = por %p94, %p95
      %p97 = scmp.ne.s32.totalorder %s83, %s84
      %p98 = scmp.eq.s32.totalorder %s27, 1
      %p99 = por %p97, %p98
      %p101 = scmp.ne.s32.totalorder %s84, %s100
      %p102 = scmp.eq.s32.totalorder %s27, 0
      %p103 = por %p101, %p102
      %s105 = sadd.s32 %s104, 1
      %p108 = scmp.eq.s32.totalorder %s21, 1
      %p109 = scmp.ne.s32.totalorder %s104, %s106
      %p110 = scmp.eq.s32.totalorder %s21, 0
      %p111 = por %p109, %p110
      %p112 = scmp.ne.s32.totalorder %s104, %s106
      %p113 = scmp.eq.s32.totalorder %s26, 1
      %p114 = por %p112, %p113
      %p115 = scmp.ne.s32.totalorder %s106, %s107
      %p116 = scmp.eq.s32.totalorder %s26, 0
      %p117 = por %p115, %p116
      %p118 = scmp.ne.s32.totalorder %s106, %s107
      %p119 = scmp.eq.s32.totalorder %s27, 1
      %p120 = por %p118, %p119
      %p122 = scmp.ne.s32.totalorder %s107, %s121
      %p123 = scmp.eq.s32.totalorder %s27, 0
      %p124 = por %p122, %p123
      %s126 = sadd.s32 %s125, 1
      %p129 = scmp.eq.s32.totalorder %s21, 1
      %p130 = scmp.ne.s32.totalorder %s125, %s127
      %p131 = scmp.eq.s32.totalorder %s21, 0
      %p132 = por %p130, %p131
      %p133 = scmp.ne.s32.totalorder %s125, %s127
      %p134 = scmp.eq.s32.totalorder %s26, 1
      %p135 = por %p133, %p134
      %p136 = scmp.ne.s32.totalorder %s127, %s128
      %p137 = scmp.eq.s32.totalorder %s26, 0
      %p138 = por %p136, %p137
      %p139 = scmp.ne.s32.totalorder %s127, %s128
      %p140 = scmp.eq.s32.totalorder %s27, 1
      %p141 = por %p139, %p140
      %p143 = scmp.ne.s32.totalorder %s128, %s142
      %p144 = scmp.eq.s32.totalorder %s27, 0
      %p145 = por %p143, %p144
      %s146 = ssub.s32 %s28, %s47
      %s147 = ssub.s32 %s29, %s43
      %s148 = sor.u32 %s146, %s147
      %s149 = ssub.s32 %s30, %s39
      %s150 = sor.u32 %s148, %s149
      %p151 = scmp.eq.s32.totalorder %s150, 0
      %s153 = sadd.s32 %s152, 1
      %s154 = scalar_select %p151, %s152, %s153
      %p157 = pneg %p151
      %p158 = scmp.eq.s32.totalorder %s21, 1
      %p159 = por %p157, %p158
      %p160 = scmp.ne.s32.totalorder %s152, %s155
      %p161 = scmp.eq.s32.totalorder %s21, 0
      %p162 = por %p160, %p161
      %p163 = scmp.ne.s32.totalorder %s152, %s155
      %p164 = scmp.eq.s32.totalorder %s26, 1
      %p165 = por %p163, %p164
      %p166 = scmp.ne.s32.totalorder %s155, %s156
      %p167 = scmp.eq.s32.totalorder %s26, 0
      %p168 = por %p166, %p167
      %p169 = scmp.ne.s32.totalorder %s155, %s156
      %p170 = scmp.eq.s32.totalorder %s27, 1
      %p171 = por %p169, %p170
      %p173 = scmp.ne.s32.totalorder %s156, %s172
      %p174 = scmp.eq.s32.totalorder %s27, 0
      %p175 = por %p173, %p174
      %p176 = scmp.le.s32.totalorder 1, %s21
      %p177 = scmp.lt.s32.totalorder %s21, 3
      %p178 = pnand %p176, %p177
      %p179 = pneg %p178
      // Predicated region
      $region9: #{tpu_custom_call.1} parent=5 // pred_check
        _
      $region10: #{tpu_custom_call.1} parent=5 // pred_check_branch
        %181 = sbr.rel (%p178) target = $region12
      $region11: #{tpu_custom_call.1} parent=5 // pred_region
        %s182 = ssub.s32 %s21, 1
        // Predicated region
        $region13: #{tpu_custom_call.1} parent=11 // pred_check
          %p183 = pneg %p117
        $region14: #{tpu_custom_call.1} parent=11 // pred_check_branch
          %185 = sbr.rel (%p183) target = $region16
        $region15: #{tpu_custom_call.1} parent=11 // pred_region
          %s187 = ssub.s32 16, 16
          %188 = vsyncadd [#allocation6], %s187
          %s190 = sshll.u32 %s2, 4
          %s191 = int_to_ptr.vmem [resolvable:$true] %s190
          %193 = dma.vmem_to_smem %s191, 16, [#allocation9], [#allocation6]
        $region16: #{tpu_custom_call.1} parent=11 // pred_fallthru
          _
        // Predicated region
        $region17: #{tpu_custom_call.1} parent=11 // pred_check
          %p194 = pneg %p138
        $region18: #{tpu_custom_call.1} parent=11 // pred_check_branch
          %196 = sbr.rel (%p194) target = $region20
        $region19: #{tpu_custom_call.1} parent=11 // pred_region
          _
        $region20: #{tpu_custom_call.1} parent=11 // pred_fallthru
          _
      $region12: #{tpu_custom_call.1} parent=5 // pred_fallthru
        _
      %p197 = scmp.lt.s32.totalorder %s21, 2
      // Predicated region
      $region21: #{tpu_custom_call.1} parent=5 // pred_check
        %p198 = pneg %p197
      $region22: #{tpu_custom_call.1} parent=5 // pred_check_branch
        %200 = sbr.rel (%p198) target = $region24
      $region23: #{tpu_custom_call.1} parent=5 // pred_region
        // Predicated region
        $region25: #{tpu_custom_call.1} parent=23 // pred_check
          %p201 = pneg %p62
        $region26: #{tpu_custom_call.1} parent=23 // pred_check_branch
          %203 = sbr.rel (%p201) target = $region28
        $region27: #{tpu_custom_call.1} parent=23 // pred_region
          %s204 = sand.u32 %s52, 1
          %s205 = scalar_lea.sflag [#allocation4], %s204
          %s206 = sand.u32 %s52, 1
          %s207 = smul.addr %s206, 16
          %s208 = scalar_lea.vmem [#allocation3], %s207
          %s210 = ssub.s32 256, 256
          %211 = vsyncadd %s205, %s210
          %s212 = smul.addr %s28, 4
          %s213 = sadd.s32 %s29, %s212
          %s214 = smul.addr %s213, 64
          %s215 = scalar_lea.hbm %s0, %s214
          %s216 = sshll.u32 %s208, 4
          %s217 = int_to_ptr.vmem [resolvable:$true] %s216
          %222 = dma.hbm_to_vmem [thread:$0]  %s215, 256, %s217, %s205, 64, 64, 4
        $region28: #{tpu_custom_call.1} parent=23 // pred_fallthru
          _
        // Predicated region
        $region29: #{tpu_custom_call.1} parent=23 // pred_check
          %p223 = pneg %p90
        $region30: #{tpu_custom_call.1} parent=23 // pred_check_branch
          %225 = sbr.rel (%p223) target = $region32
        $region31: #{tpu_custom_call.1} parent=23 // pred_region
          %s226 = sand.u32 %s80, 1
          %s227 = scalar_lea.sflag [#allocation8], %s226
          %s228 = sand.u32 %s80, 1
          %s229 = smul.addr %s228, 16
          %s230 = scalar_lea.vmem [#allocation7], %s229
          %s232 = ssub.s32 256, 256
          %233 = vsyncadd %s227, %s232
          %s234 = smul.addr %s28, 4
          %s235 = sadd.s32 %s30, %s234
          %s236 = smul.addr %s235, 64
          %s237 = scalar_lea.hbm %s1, %s236
          %s238 = sshll.u32 %s230, 4
          %s239 = int_to_ptr.vmem [resolvable:$true] %s238
          %244 = dma.hbm_to_vmem [thread:$0]  %s237, 256, %s239, %s227, 64, 64, 4
        $region32: #{tpu_custom_call.1} parent=23 // pred_fallthru
          _
      $region24: #{tpu_custom_call.1} parent=5 // pred_fallthru
        _
      %p245 = scmp.le.s32.totalorder 1, %s21
      %p246 = scmp.lt.s32.totalorder %s21, 3
      %p247 = pnand %p245, %p246
      %p248 = pneg %p247
      // Predicated region
      $region33: #{tpu_custom_call.1} parent=5 // pred_check
        _
      $region34: #{tpu_custom_call.1} parent=5 // pred_check_branch
        %250 = sbr.rel (%p247) target = $region36
      $region35: #{tpu_custom_call.1} parent=5 // pred_region
        %s251 = ssub.s32 %s21, 1
        %s252 = sand.u32 %s55, 1
        %s253 = scalar_lea.sflag [#allocation4], %s252
        %s254 = sand.u32 %s55, 1
        %s255 = smul.addr %s254, 16
        %s256 = scalar_lea.vmem [#allocation3], %s255
        // Predicated region
        $region37: #{tpu_custom_call.1} parent=35 // pred_check
          %p257 = pneg %p68
        $region38: #{tpu_custom_call.1} parent=35 // pred_check_branch
          %259 = sbr.rel (%p257) target = $region40
        $region39: #{tpu_custom_call.1} parent=35 // pred_region
          %260 = dma.done %s253, 256
        $region40: #{tpu_custom_call.1} parent=35 // pred_fallthru
          _
        %s261 = sand.u32 %s83, 1
        %s262 = scalar_lea.sflag [#allocation8], %s261
        %s263 = sand.u32 %s83, 1
        %s264 = smul.addr %s263, 16
        %s265 = scalar_lea.vmem [#allocation7], %s264
        // Predicated region
        $region41: #{tpu_custom_call.1} parent=35 // pred_check
          %p266 = pneg %p96
        $region42: #{tpu_custom_call.1} parent=35 // pred_check_branch
          %268 = sbr.rel (%p266) target = $region44
        $region43: #{tpu_custom_call.1} parent=35 // pred_region
          %269 = dma.done %s262, 256
        $region44: #{tpu_custom_call.1} parent=35 // pred_fallthru
          _
        // Predicated region
        $region45: #{tpu_custom_call.1} parent=35 // pred_check
          %p270 = pneg %p117
        $region46: #{tpu_custom_call.1} parent=35 // pred_check_branch
          %272 = sbr.rel (%p270) target = $region48
        $region47: #{tpu_custom_call.1} parent=35 // pred_region
          %273 = dma.done [#allocation6], 16
        $region48: #{tpu_custom_call.1} parent=35 // pred_fallthru
          _
        %274 = sfence
        %s275 = sand.u32 %s55, 1
        %s276 = scalar_lea.sflag [#allocation4], %s275
        %s277 = sand.u32 %s55, 1
        %s278 = smul.addr %s277, 16
        %s279 = scalar_lea.vmem [#allocation3], %s278
        %p280 = pneg %p68
        %p281 = pneg %p65
        %s282 = sand.u32 %s83, 1
        %s283 = scalar_lea.sflag [#allocation8], %s282
        %s284 = sand.u32 %s83, 1
        %s285 = smul.addr %s284, 16
        %s286 = scalar_lea.vmem [#allocation7], %s285
        %p287 = pneg %p96
        %p288 = pneg %p93
        %p289 = pneg %p117
        %p290 = pneg %p114
        %p291 = pneg %p138
        %p292 = pneg %p135
        %p293 = pneg %p168
        %p294 = pneg %p165
        %s295 = sand.u32 %s155, 1
        %s296 = scalar_lea.sflag [#allocation5], %s295
        %s297 = sand.u32 %s155, 1
        %s298 = smul.addr %s297, 32
        %s299 = scalar_lea.vmem [#allocation10], %s298
        %v301 = vlaneseq
        %v302 = vand.u32 %v301, 127
        %s303 = smul.u32 %s33, 16
        %v304 = vstv %s303
        %v305 = vadd.s32 %v302, %v304
        %s306 = sld [smem:[#allocation9 + %s31]]
        %v307 = vstv %s306
        %vm308 = vcmp.ge.s32.totalorder %v305, %v307
        %s309 = sld [smem:[#allocation2]]
        %v310 = vld [vmem:[%s256] sm:$0xf]
        %v311 = vld [vmem:[%s265] sm:$0xf]
        %v312 = vstv %s309
        %313 = vxpose.xlu0.c.b16.start [1/8] %v310, 128
        %314 = vxpose.xlu0.c.b16.cont [2/8] 0, 128
        %315 = vxpose.xlu0.c.b16.cont [3/8] 0, 128
        %316 = vxpose.xlu0.c.b16.cont [4/8] 0, 128
        %317 = vxpose.xlu0.c.b16.cont [5/8] 0, 128
        %318 = vxpose.xlu0.c.b16.cont [6/8] 0, 128
        %319 = vxpose.xlu0.c.b16.cont [7/8] 0, 128
        %320 = vxpose.xlu0.c.b16.end [8/8] 0, 128
        %v321 = vpop.trf.xlu0
        %v322 = vpop.trf.xlu0
        %v323 = vpop.trf.xlu0
        %v324 = vpop.trf.xlu0
        %v325 = vpop.trf.xlu0
        %v326 = vpop.trf.xlu0
        %v327 = vpop.trf.xlu0
        %v328 = vpop.trf.xlu0
        %vm329 = vcmask 64512
        %v331 = vsel %vm329, %v321, 0
        %vm333 = vcmask 1043456
        %v335 = vsel %vm333, %v311, 0
        %337 = vmatprep.subr.bf16.mxu0 0
        %338 = vmatpush1.bf16.msra.mxu0 %v335
        %339 = vmatprep.subr.bf16.mxu0 0
        %340 = vmatpush1.bf16.msra.mxu0 0
        %341 = vmatprep.subr.bf16.mxu0 0
        %342 = vmatpush1.bf16.msra.mxu0 0
        %343 = vmatprep.subr.bf16.mxu0 0
        %344 = vmatpush1.bf16.msra.mxu0 0
        %345 = vmatprep.subr.bf16.mxu0 0
        %346 = vmatpush1.bf16.msra.mxu0 0
        %347 = vmatprep.subr.bf16.mxu0 0
        %348 = vmatpush1.bf16.msra.mxu0 0
        %349 = vmatprep.subr.bf16.mxu0 0
        %350 = vmatpush1.bf16.msra.mxu0 0
        %351 = vmatprep.subr.bf16.mxu0 0
        %352 = vmatpush1.bf16.msra.mxu0 0
        %353 = vmatprep.subr.bf16.mxu0 0
        %354 = vmatpush1.bf16.msra.mxu0 0
        %355 = vmatprep.subr.bf16.mxu0 0
        %356 = vmatpush1.bf16.msra.mxu0 0
        %357 = vmatprep.subr.bf16.mxu0 0
        %358 = vmatpush1.bf16.msra.mxu0 0
        %359 = vmatprep.subr.bf16.mxu0 0
        %360 = vmatpush1.bf16.msra.mxu0 0
        %361 = vmatprep.subr.bf16.mxu0 0
        %362 = vmatpush1.bf16.msra.mxu0 0
        %363 = vmatprep.subr.bf16.mxu0 0
        %364 = vmatpush1.bf16.msra.mxu0 0
        %365 = vmatprep.subr.bf16.mxu0 0
        %366 = vmatpush1.bf16.msra.mxu0 0
        %367 = vmatprep.subr.bf16.mxu0 0
        %368 = vmatpush1.bf16.msra.mxu0 0
        %369 = vmatprep.mubr.bf16.mxu0 0
        %370 = vmatmul.mubr.bf16.gmra.mrb[0].mxu0 %v331
        %v371 = vpop.f32.mrb[0].mxu0
        %v372 = vadd.f32 %v312, %v371
        %v373 = vpop.f32.mrb[0].mxu0
        %v374 = vpop.f32.mrb[0].mxu0
        %v375 = vpop.f32.mrb[0].mxu0
        %376 = vdwg.mxu0
        %v377 = vsel %vm308, -3.4028235e+38, %v372
        %vm378 = vcmask 130048
        %379 = vst.msk [vmem:[%s299] sm:$0xff] %vm378, %v377
        %s380 = scalar_lea.vmem %s256, 4 [#allocation3]
        %v381 = vld [vmem:[%s380] sm:$0xf]
        %s382 = scalar_lea.vmem %s265, 4 [#allocation7]
        %v383 = vld [vmem:[%s382] sm:$0xf]
        %384 = vxpose.xlu0.c.b16.start [1/8] %v381, 128
        %385 = vxpose.xlu0.c.b16.cont [2/8] 0, 128
        %386 = vxpose.xlu0.c.b16.cont [3/8] 0, 128
        %387 = vxpose.xlu0.c.b16.cont [4/8] 0, 128
        %388 = vxpose.xlu0.c.b16.cont [5/8] 0, 128
        %389 = vxpose.xlu0.c.b16.cont [6/8] 0, 128
        %390 = vxpose.xlu0.c.b16.cont [7/8] 0, 128
        %391 = vxpose.xlu0.c.b16.end [8/8] 0, 128
        %v392 = vpop.trf.xlu0
        %v393 = vpop.trf.xlu0
        %v394 = vpop.trf.xlu0
        %v395 = vpop.trf.xlu0
        %v396 = vpop.trf.xlu0
        %v397 = vpop.trf.xlu0
        %v398 = vpop.trf.xlu0
        %v399 = vpop.trf.xlu0
        %v401 = vsel %vm329, %v392, 0
        %v404 = vsel %vm333, %v383, 0
        %406 = vmatprep.subr.bf16.mxu0 0
        %407 = vmatpush1.bf16.msra.mxu0 %v404
        %408 = vmatprep.subr.bf16.mxu0 0
        %409 = vmatpush1.bf16.msra.mxu0 0
        %410 = vmatprep.subr.bf16.mxu0 0
        %411 = vmatpush1.bf16.msra.mxu0 0
        %412 = vmatprep.subr.bf16.mxu0 0
        %413 = vmatpush1.bf16.msra.mxu0 0
        %414 = vmatprep.subr.bf16.mxu0 0
        %415 = vmatpush1.bf16.msra.mxu0 0
        %416 = vmatprep.subr.bf16.mxu0 0
        %417 = vmatpush1.bf16.msra.mxu0 0
        %418 = vmatprep.subr.bf16.mxu0 0
        %419 = vmatpush1.bf16.msra.mxu0 0
        %420 = vmatprep.subr.bf16.mxu0 0
        %421 = vmatpush1.bf16.msra.mxu0 0
        %422 = vmatprep.subr.bf16.mxu0 0
        %423 = vmatpush1.bf16.msra.mxu0 0
        %424 = vmatprep.subr.bf16.mxu0 0
        %425 = vmatpush1.bf16.msra.mxu0 0
        %426 = vmatprep.subr.bf16.mxu0 0
        %427 = vmatpush1.bf16.msra.mxu0 0
        %428 = vmatprep.subr.bf16.mxu0 0
        %429 = vmatpush1.bf16.msra.mxu0 0
        %430 = vmatprep.subr.bf16.mxu0 0
        %431 = vmatpush1.bf16.msra.mxu0 0
        %432 = vmatprep.subr.bf16.mxu0 0
        %433 = vmatpush1.bf16.msra.mxu0 0
        %434 = vmatprep.subr.bf16.mxu0 0
        %435 = vmatpush1.bf16.msra.mxu0 0
        %436 = vmatprep.subr.bf16.mxu0 0
        %437 = vmatpush1.bf16.msra.mxu0 0
        %438 = vmatprep.mubr.bf16.mxu0 0
        %439 = vmatmul.mubr.bf16.gmra.mrb[0].mxu0 %v401
        %v440 = vpop.f32.mrb[0].mxu0
        %v441 = vadd.f32 %v312, %v440
        %v442 = vpop.f32.mrb[0].mxu0
        %v443 = vpop.f32.mrb[0].mxu0
        %v444 = vpop.f32.mrb[0].mxu0
        %445 = vdwg.mxu0
        %v446 = vsel %vm308, -3.4028235e+38, %v441
        %s447 = scalar_lea.vmem %s299, 8 [#allocation10]
        %448 = vst.msk [vmem:[%s447] sm:$0xff] %vm378, %v446
        %s449 = scalar_lea.vmem %s256, 8 [#allocation3]
        %v450 = vld [vmem:[%s449] sm:$0xf]
        %s451 = scalar_lea.vmem %s265, 8 [#allocation7]
        %v452 = vld [vmem:[%s451] sm:$0xf]
        %453 = vxpose.xlu0.c.b16.start [1/8] %v450, 128
        %454 = vxpose.xlu0.c.b16.cont [2/8] 0, 128
        %455 = vxpose.xlu0.c.b16.cont [3/8] 0, 128
        %456 = vxpose.xlu0.c.b16.cont [4/8] 0, 128
        %457 = vxpose.xlu0.c.b16.cont [5/8] 0, 128
        %458 = vxpose.xlu0.c.b16.cont [6/8] 0, 128
        %459 = vxpose.xlu0.c.b16.cont [7/8] 0, 128
        %460 = vxpose.xlu0.c.b16.end [8/8] 0, 128
        %v461 = vpop.trf.xlu0
        %v462 = vpop.trf.xlu0
        %v463 = vpop.trf.xlu0
        %v464 = vpop.trf.xlu0
        %v465 = vpop.trf.xlu0
        %v466 = vpop.trf.xlu0
        %v467 = vpop.trf.xlu0
        %v468 = vpop.trf.xlu0
        %v470 = vsel %vm329, %v461, 0
        %v473 = vsel %vm333, %v452, 0
        %475 = vmatprep.subr.bf16.mxu0 0
        %476 = vmatpush1.bf16.msra.mxu0 %v473
        %477 = vmatprep.subr.bf16.mxu0 0
        %478 = vmatpush1.bf16.msra.mxu0 0
        %479 = vmatprep.subr.bf16.mxu0 0
        %480 = vmatpush1.bf16.msra.mxu0 0
        %481 = vmatprep.subr.bf16.mxu0 0
        %482 = vmatpush1.bf16.msra.mxu0 0
        %483 = vmatprep.subr.bf16.mxu0 0
        %484 = vmatpush1.bf16.msra.mxu0 0
        %485 = vmatprep.subr.bf16.mxu0 0
        %486 = vmatpush1.bf16.msra.mxu0 0
        %487 = vmatprep.subr.bf16.mxu0 0
        %488 = vmatpush1.bf16.msra.mxu0 0
        %489 = vmatprep.subr.bf16.mxu0 0
        %490 = vmatpush1.bf16.msra.mxu0 0
        %491 = vmatprep.subr.bf16.mxu0 0
        %492 = vmatpush1.bf16.msra.mxu0 0
        %493 = vmatprep.subr.bf16.mxu0 0
        %494 = vmatpush1.bf16.msra.mxu0 0
        %495 = vmatprep.subr.bf16.mxu0 0
        %496 = vmatpush1.bf16.msra.mxu0 0
        %497 = vmatprep.subr.bf16.mxu0 0
        %498 = vmatpush1.bf16.msra.mxu0 0
        %499 = vmatprep.subr.bf16.mxu0 0
        %500 = vmatpush1.bf16.msra.mxu0 0
        %501 = vmatprep.subr.bf16.mxu0 0
        %502 = vmatpush1.bf16.msra.mxu0 0
        %503 = vmatprep.subr.bf16.mxu0 0
        %504 = vmatpush1.bf16.msra.mxu0 0
        %505 = vmatprep.subr.bf16.mxu0 0
        %506 = vmatpush1.bf16.msra.mxu0 0
        %507 = vmatprep.mubr.bf16.mxu0 0
        %508 = vmatmul.mubr.bf16.gmra.mrb[0].mxu0 %v470
        %v509 = vpop.f32.mrb[0].mxu0
        %v510 = vadd.f32 %v312, %v509
        %v511 = vpop.f32.mrb[0].mxu0
        %v512 = vpop.f32.mrb[0].mxu0
        %v513 = vpop.f32.mrb[0].mxu0
        %514 = vdwg.mxu0
        %v515 = vsel %vm308, -3.4028235e+38, %v510
        %s516 = scalar_lea.vmem %s299, 16 [#allocation10]
        %517 = vst.msk [vmem:[%s516] sm:$0xff] %vm378, %v515
        %s518 = scalar_lea.vmem %s256, 12 [#allocation3]
        %v519 = vld [vmem:[%s518] sm:$0xf]
        %s520 = scalar_lea.vmem %s265, 12 [#allocation7]
        %v521 = vld [vmem:[%s520] sm:$0xf]
        %522 = vxpose.xlu0.c.b16.start [1/8] %v519, 128
        %523 = vxpose.xlu0.c.b16.cont [2/8] 0, 128
        %524 = vxpose.xlu0.c.b16.cont [3/8] 0, 128
        %525 = vxpose.xlu0.c.b16.cont [4/8] 0, 128
        %526 = vxpose.xlu0.c.b16.cont [5/8] 0, 128
        %527 = vxpose.xlu0.c.b16.cont [6/8] 0, 128
        %528 = vxpose.xlu0.c.b16.cont [7/8] 0, 128
        %529 = vxpose.xlu0.c.b16.end [8/8] 0, 128
        %v530 = vpop.trf.xlu0
        %v531 = vpop.trf.xlu0
        %v532 = vpop.trf.xlu0
        %v533 = vpop.trf.xlu0
        %v534 = vpop.trf.xlu0
        %v535 = vpop.trf.xlu0
        %v536 = vpop.trf.xlu0
        %v537 = vpop.trf.xlu0
        %v539 = vsel %vm329, %v530, 0
        %v542 = vsel %vm333, %v521, 0
        %544 = vmatprep.subr.bf16.mxu0 0
        %545 = vmatpush1.bf16.msra.mxu0 %v542
        %546 = vmatprep.subr.bf16.mxu0 0
        %547 = vmatpush1.bf16.msra.mxu0 0
        %548 = vmatprep.subr.bf16.mxu0 0
        %549 = vmatpush1.bf16.msra.mxu0 0
        %550 = vmatprep.subr.bf16.mxu0 0
        %551 = vmatpush1.bf16.msra.mxu0 0
        %552 = vmatprep.subr.bf16.mxu0 0
        %553 = vmatpush1.bf16.msra.mxu0 0
        %554 = vmatprep.subr.bf16.mxu0 0
        %555 = vmatpush1.bf16.msra.mxu0 0
        %556 = vmatprep.subr.bf16.mxu0 0
        %557 = vmatpush1.bf16.msra.mxu0 0
        %558 = vmatprep.subr.bf16.mxu0 0
        %559 = vmatpush1.bf16.msra.mxu0 0
        %560 = vmatprep.subr.bf16.mxu0 0
        %561 = vmatpush1.bf16.msra.mxu0 0
        %562 = vmatprep.subr.bf16.mxu0 0
        %563 = vmatpush1.bf16.msra.mxu0 0
        %564 = vmatprep.subr.bf16.mxu0 0
        %565 = vmatpush1.bf16.msra.mxu0 0
        %566 = vmatprep.subr.bf16.mxu0 0
        %567 = vmatpush1.bf16.msra.mxu0 0
        %568 = vmatprep.subr.bf16.mxu0 0
        %569 = vmatpush1.bf16.msra.mxu0 0
        %570 = vmatprep.subr.bf16.mxu0 0
        %571 = vmatpush1.bf16.msra.mxu0 0
        %572 = vmatprep.subr.bf16.mxu0 0
        %573 = vmatpush1.bf16.msra.mxu0 0
        %574 = vmatprep.subr.bf16.mxu0 0
        %575 = vmatpush1.bf16.msra.mxu0 0
        %576 = vmatprep.mubr.bf16.mxu0 0
        %577 = vmatmul.mubr.bf16.gmra.mrb[0].mxu0 %v539
        %v578 = vpop.f32.mrb[0].mxu0
        %v579 = vadd.f32 %v312, %v578
        %v580 = vpop.f32.mrb[0].mxu0
        %v581 = vpop.f32.mrb[0].mxu0
        %v582 = vpop.f32.mrb[0].mxu0
        %583 = vdwg.mxu0
        %v584 = vsel %vm308, -3.4028235e+38, %v579
        %s585 = scalar_lea.vmem %s299, 24 [#allocation10]
        %586 = vst.msk [vmem:[%s585] sm:$0xff] %vm378, %v584
        %s587 = sand.u32 %s155, 1
        %s588 = scalar_lea.sflag [#allocation5], %s587
        %s589 = sand.u32 %s155, 1
        %s590 = smul.addr %s589, 32
        %s591 = scalar_lea.vmem [#allocation10], %s590
        // Predicated region
        $region49: #{tpu_custom_call.1} parent=35 // pred_check
          %p592 = pneg %p165
        $region50: #{tpu_custom_call.1} parent=35 // pred_check_branch
          %594 = sbr.rel (%p592) target = $region52
        $region51: #{tpu_custom_call.1} parent=35 // pred_region
          %s596 = ssub.s32 512, 512
          %597 = vsyncadd %s588, %s596
          %s598 = sadd.s32 %s33, %s32
          %s599 = smul.addr %s31, 4
          %s600 = sadd.s32 %s598, %s599
          %s601 = smul.addr %s600, 128
          %s602 = scalar_lea.hbm %s4, %s601
          %s603 = sshll.u32 %s591, 4
          %s604 = int_to_ptr.vmem [resolvable:$true] %s603
          %609 = dma.vmem_to_hbm [thread:$0]  %s604, 512, %s602, %s588, 128, 128, 8
        $region52: #{tpu_custom_call.1} parent=35 // pred_fallthru
          _
      $region36: #{tpu_custom_call.1} parent=5 // pred_fallthru
        _
      %p610 = scmp.le.s32.totalorder 2, %s21
      // Predicated region
      $region53: #{tpu_custom_call.1} parent=5 // pred_check
        %p611 = pneg %p610
      $region54: #{tpu_custom_call.1} parent=5 // pred_check_branch
        %613 = sbr.rel (%p611) target = $region56
      $region55: #{tpu_custom_call.1} parent=5 // pred_region
        %s614 = ssub.s32 %s21, 2
        // Predicated region
        $region57: #{tpu_custom_call.1} parent=55 // pred_check
          %p615 = pneg %p171
        $region58: #{tpu_custom_call.1} parent=55 // pred_check_branch
          %617 = sbr.rel (%p615) target = $region60
        $region59: #{tpu_custom_call.1} parent=55 // pred_region
          %s618 = sand.u32 %s156, 1
          %s619 = scalar_lea.sflag [#allocation5], %s618
          %s620 = sand.u32 %s156, 1
          %s621 = smul.addr %s620, 32
          %s622 = scalar_lea.vmem [#allocation10], %s621
          %623 = dma.done %s619, 512
        $region60: #{tpu_custom_call.1} parent=55 // pred_fallthru
          _
      $region56: #{tpu_custom_call.1} parent=5 // pred_fallthru
        _
    $region6: #{tpu_custom_call.1} parent=1 // loop_footer
      %s25 = sadd.s32 1, %s21
    $region7: #{tpu_custom_call.1} parent=1 // loop_footer_branch
      %20 = sbr.rel target = $region3
    $region8: #{tpu_custom_call.1} parent=1 // loop_exit
      _
    %624 = vsyncpa [#allocation4], 1
    %s625 = scalar_lea.sflag [#allocation4], 1
    %626 = vsyncpa %s625, 1
    %627 = vsyncpa [#allocation8], 1
    %s628 = scalar_lea.sflag [#allocation8], 1
    %629 = vsyncpa %s628, 1
    %630 = vsyncpa [#allocation5], 1
    %s631 = scalar_lea.sflag [#allocation5], 1
    %632 = vsyncpa %s631, 1
    %633 = vsyncpa [#allocation6], 1
    %s634 = scalar_lea.sflag [#allocation6], 1
    %635 = vsyncpa %s634, 1

</llo_original>
